<compile_context>
chip_gen: v5e
topology: v5e:2x2
jax: 0.10.0
libtpu: 0.0.40
codegen_flags: <defaults>
</compile_context>

<pallas_src>
import math

import jax
import jax.numpy as jnp
from jax.experimental import pallas as pl
from jax.experimental.pallas import tpu as pltpu


def gcn_kernel(x_ref, adjb_ref, wcat_ref, wo_ref, b_ref, out_ref):
    """One grid step = one (M, C) slab of flattened (batch, node) rows.

    wcat = [W0' | Wxa]  (W0' = W0t @ Wagg fold, Wxa = fused lin1+lin2 x-path);
    b rows: 0 = folded lin0 bias, 1 = fused lin1+lin2 bias, 2 = output bias.
    """
    O = wo_ref.shape[1]
    x = x_ref[...].astype(jnp.bfloat16)                       # (M, C)
    b = b_ref[...]                                            # (8, O) f32

    # Single wide x-path matmul; split columns into the (folded) lin0 output
    # and the x contribution to the fused lin1+lin2.
    hcat = jnp.dot(x, wcat_ref[...], preferred_element_type=jnp.float32)  # (M, 2O)
    h0 = hcat[:, :O] + b[0:1, :]
    # Neighborhood aggregation: block-diagonal adjacency @ h0 == per-batch bmm.
    agg = jnp.dot(adjb_ref[...], h0.astype(jnp.bfloat16),
                  preferred_element_type=jnp.float32)
    h2 = hcat[:, O:] + agg + b[1:2, :]
    # Exact erf-based GELU in f32 (matches torch.nn.functional.gelu default).
    g = 0.5 * h2 * (1.0 + jax.lax.erf(h2 * 0.7071067811865476))
    o = jnp.dot(g.astype(jnp.bfloat16), wo_ref[...],
                preferred_element_type=jnp.float32) + b[2:3, :]
    # Residual: re-read the already-resident input block (exact f32).
    out_ref[...] = x_ref[...] + o


def _pick_batch_block(B, N, target_rows=512):
    """Choose BB (batch elems per slab) and grid length.

    Prefers >= 2 grid steps (pipelining / v7x megacore), slabs of at most
    `target_rows` rows (bounds kron(I_BB, adj) VMEM and its zero-block waste),
    and respects the sublane constraint (BB*N % 8 == 0 when the row axis is
    actually tiled).
    """
    best = None
    for bb in range(1, B + 1):
        if B % bb:
            continue
        grid_b = B // bb
        M = bb * N
        if grid_b > 1 and M % 8 != 0:
            continue
        multi = grid_b >= 2
        fits = M <= target_rows
        key = (multi, fits, M if fits else -M)
        if best is None or key > best[0]:
            best = (key, bb, grid_b)
    if best is None:                 # e.g. N % 8 != 0 with no divisor fixing it
        return B, 1
    return best[1], best[2]


def _vmem_capacity_bytes(default=128 << 20):
    try:
        return int(pltpu.get_tpu_info().vmem_capacity_bytes)
    except Exception:
        return int(default)


def prepare_params(torch_params, in_channels, dtype=jnp.bfloat16):
    """Torch-layout (out, in) weights -> fused / folded / packed kernel params."""
    (w0, b0), (w1, b1), (w2, b2), (wo, bo) = torch_params
    C = in_channels
    O = w0.shape[0]
    assert C == O, "GCNConv residual requires in_channels == out_channels"

    w0t = w0.T                                # (C, O)
    w1a = w1[:, :C].T                         # (C, O)  acts on x
    w1b = w1[:, C:].T                         # (O, O)  acts on agg
    w2t = w2.T                                # (O, O)
    wot = wo.T                                # (O, O)

    # Fuse lin1 -> lin2 (no nonlinearity between them), once, in f32.
    wxa = w1a @ w2t                           # x path of fused lin1+lin2
    wagg = w1b @ w2t                          # agg path of fused lin1+lin2
    b_fused = b1 @ w2t + b2

    # Fold W_agg through the linear aggregation into lin0.
    w0f = w0t @ wagg                          # (C, O)
    b0f = b0 @ wagg                           # (O,)

    # Pack both x-path weights into one wide RHS -> single MXU matmul on x.
    wcat = jnp.concatenate([w0f, wxa], axis=1).astype(dtype)   # (C, 2*O)
    wo_k = wot.astype(dtype)                                   # (O, O)

    biases = jnp.zeros((8, O), jnp.float32)
    biases = biases.at[0].set(b0f)
    biases = biases.at[1].set(b_fused)
    biases = biases.at[2].set(bo)
    return (wcat, wo_k), biases


def gcn_conv(x, adj, weights, biases, *, target_rows=512):
    """x: (B, N, C) f32; adj: (N, N) f32, symmetric with zero diagonal."""
    B, N, C = x.shape
    wcat, wo = weights
    O = wo.shape[1]
    assert C == O, "residual add requires in_channels == out_channels"
    assert wcat.shape == (C, 2 * O)

    BB, grid_b = _pick_batch_block(B, N, target_rows)
    M = BB * N
    R = B * N

    # True-channel-width I/O: no wrapper pad / unpad passes over HBM.
    x2d = x.reshape(R, C)

    # Block-diagonal adjacency lets a single 2-D matmul aggregate all BB batch
    # elements of the slab. BB is bounded by target_rows/N, so the (M, M) tile
    # and its zero-block waste stay small.
    if BB == 1:
        adjb = adj.astype(wcat.dtype)
    else:
        adjb = jnp.kron(jnp.eye(BB, dtype=adj.dtype), adj).astype(wcat.dtype)
    # TODO(synk): for N >= 128 drop the kron and K-tile the aggregation over
    # node chunks with a VMEM accumulator (or a per-batch dot_general) so the
    # adjacency never needs a full (M, M) VMEM tile.

    itemsize = jnp.dtype(wcat.dtype).itemsize
    act_bytes = M * C * 4                                   # one x or out block (f32)
    const_bytes = (M * M + C * 2 * O + O * O) * itemsize + 8 * O * 4
    temp_bytes = M * 4 * O * 4                              # live f32 intermediates
    vmem_need = 2 * (2 * act_bytes) + 2 * const_bytes + temp_bytes
    hard_cap = min(_vmem_capacity_bytes() // 2, 96 << 20)   # ~32 MiB v7x, 64 MiB v5e/v6e
    vmem_limit = int(min(max(4 << 20, int(1.5 * vmem_need)), hard_cap))

    flops = 2 * R * (C * 2 * O + M * O + O * O)
    bytes_accessed = (2 * R * C * 4
                      + grid_b * ((M * M + C * 2 * O + O * O) * itemsize + 8 * O * 4))

    full = lambda shape: pl.BlockSpec(shape, lambda i: (0, 0))

    out2d = pl.pallas_call(
        gcn_kernel,
        out_shape=jax.ShapeDtypeStruct((R, C), jnp.float32),
        grid_spec=pltpu.PrefetchScalarGridSpec(
            num_scalar_prefetch=0,
            grid=(grid_b,),
            in_specs=[
                pl.BlockSpec((M, C), lambda i: (i, 0)),     # x rows (f32, true width)
                full((M, M)),                               # block-diag adjacency (bf16)
                full((C, 2 * O)),                           # packed [W0' | Wxa] (bf16)
                full((O, O)),                               # W_out (bf16)
                full((8, O)),                               # packed biases (f32)
            ],
            out_specs=pl.BlockSpec((M, C), lambda i: (i, 0)),
        ),
        compiler_params=pltpu.CompilerParams(
            dimension_semantics=("parallel",),
            vmem_limit_bytes=vmem_limit),
        cost_estimate=pl.CostEstimate(
            flops=flops, transcendentals=R * O, bytes_accessed=bytes_accessed),
    )(x2d, adjb, wcat, wo, biases)

    return out2d.reshape(B, N, C)


def edge_index_to_adj(edge_index, num_nodes):
    adj = jnp.zeros((num_nodes, num_nodes), jnp.float32)
    adj = adj.at[edge_index[0], edge_index[1]].set(1.0)
    adj = adj.at[edge_index[1], edge_index[0]].set(1.0)
    # zero the diagonal (matches the for-loop in the torch module)
    adj = adj * (1.0 - jnp.eye(num_nodes, dtype=jnp.float32))
    return adj


def init_linear(key, fan_in, fan_out):
    """Deterministic init mimicking nn.Linear: U(-1/sqrt(fan_in), 1/sqrt(fan_in))."""
    kw, kb = jax.random.split(key)
    bound = 1.0 / math.sqrt(fan_in)
    w = jax.random.uniform(kw, (fan_out, fan_in), jnp.float32, -bound, bound)
    b = jax.random.uniform(kb, (fan_out,), jnp.float32, -bound, bound)
    return w, b


def reference_forward(x, adj, torch_params):
    """Plain-JAX f32 reference mirroring the PyTorch forward (torch-layout weights)."""
    (w0, b0), (w1, b1), (w2, b2), (wo, bo) = torch_params
    h0 = x @ w0.T + b0
    agg = jnp.einsum('ij,bjk->bik', adj, h0)
    cat = jnp.concatenate([x, agg], axis=-1)
    h1 = cat @ w1.T + b1
    h2 = h1 @ w2.T + b2
    g = 0.5 * h2 * (1.0 + jax.lax.erf(h2 / jnp.sqrt(2.0)))
    o = g @ wo.T + bo
    return x + o


def fused_reference(x, adj, weights, biases):
    """Plain-JAX mirror of the kernel's fused/folded bf16 arithmetic (tight check)."""
    wcat, wo = weights
    O = wo.shape[1]
    xb = x.astype(wcat.dtype)
    adjb = adj.astype(wcat.dtype)
    b0f, bf, bo = biases[0], biases[1], biases[2]
    hcat = jnp.einsum('bnc,co->bno', xb, wcat, preferred_element_type=jnp.float32)
    h0 = hcat[..., :O] + b0f
    agg = jnp.einsum('ij,bjo->bio', adjb, h0.astype(wcat.dtype),
                     preferred_element_type=jnp.float32)
    h2 = hcat[..., O:] + agg + bf
    g = 0.5 * h2 * (1.0 + jax.lax.erf(h2 * 0.7071067811865476))
    o = jnp.einsum('bno,op->bnp', g.astype(wcat.dtype), wo,
                   preferred_element_type=jnp.float32) + bo
    return x + o


if __name__ == "__main__":
    B, N, C = 2, 8, 32          # batch, num_nodes, channels (in_channels == out_channels)
    O = C

    key = jax.random.PRNGKey(0)
    kx, k0, k1, k2, ko = jax.random.split(key, 5)

    x = jax.random.normal(kx, (B, N, C), jnp.float32)

    # deterministic small edge list: a ring over the N nodes
    src = jnp.arange(N, dtype=jnp.int32)
    dst = (src + 1) % N
    edge_index = jnp.stack([src, dst], axis=0)          # (2, E)
    adj = edge_index_to_adj(edge_index, N)

    # parameters in torch layout (out, in)
    w0, b0 = init_linear(k0, C, O)
    w1, b1 = init_linear(k1, 2 * O, O)
    w2, b2 = init_linear(k2, O, O)
    wo, bo = init_linear(ko, O, O)
    torch_params = ((w0, b0), (w1, b1), (w2, b2), (wo, bo))

    # fused / folded / packed bf16 kernel params
    weights, biases = prepare_params(torch_params, C)

    out = gcn_conv(x, adj, weights, biases)
    out = jax.block_until_ready(out)
    assert out.shape == (B, N, C)

    # Tight check: kernel vs. a plain-JAX mirror of the same fused bf16 arithmetic.
    ref_matched = fused_reference(x, adj, weights, biases)
    assert jnp.allclose(out, ref_matched, atol=1e-3, rtol=1e-3), \
        "kernel mismatch vs matched-precision reference"

    # Loose check: kernel vs. the f32 torch-mirroring forward (bf16 quantization tol).
    ref_f32 = reference_forward(x, adj, torch_params)
    assert jnp.allclose(out, ref_f32, atol=1e-1, rtol=1e-1), \
        "kernel drifted from the f32 reference beyond bf16 tolerance"

    print("KERNEL_OK")
</pallas_src>

<mosaic_0001>
module attributes {stable_mosaic.version = 11 : i64} {
  func.func @gcn_kernel(%arg0: i32, %arg1: memref<8x32xf32, #tpu.memory_space<vmem>>, %arg2: memref<8x8xbf16, #tpu.memory_space<vmem>>, %arg3: memref<32x64xbf16, #tpu.memory_space<vmem>>, %arg4: memref<32x32xbf16, #tpu.memory_space<vmem>>, %arg5: memref<8x32xf32, #tpu.memory_space<vmem>>, %arg6: memref<8x32xf32, #tpu.memory_space<vmem>>) attributes {dimension_semantics = [#tpu.dimension_semantics<parallel>], iteration_bounds = array<i64: 2>, scalar_prefetch = 0 : i64, scratch_operands = 0 : i64, tpu.core_type = #tpu.core_type<tc>, window_params = [{transform_indices = @transform_0, window_bounds = array<i64: 8, 32>}, {pipeline_mode = #tpu.pipeline_mode<synchronous>, transform_indices = @transform_1, window_bounds = array<i64: 8, 8>}, {pipeline_mode = #tpu.pipeline_mode<synchronous>, transform_indices = @transform_2, window_bounds = array<i64: 32, 64>}, {pipeline_mode = #tpu.pipeline_mode<synchronous>, transform_indices = @transform_3, window_bounds = array<i64: 32, 32>}, {pipeline_mode = #tpu.pipeline_mode<synchronous>, transform_indices = @transform_4, window_bounds = array<i64: 8, 32>}, {transform_indices = @transform_5, window_bounds = array<i64: 8, 32>}]} {
    %c0 = arith.constant 0 : index
    %c0_0 = arith.constant 0 : index
    %0 = vector.load %arg1[%c0, %c0_0] : memref<8x32xf32, #tpu.memory_space<vmem>>, vector<8x32xf32>
    %1 = arith.truncf %0 : vector<8x32xf32> to vector<8x32xbf16>
    %c0_1 = arith.constant 0 : index
    %c0_2 = arith.constant 0 : index
    %2 = vector.load %arg5[%c0_1, %c0_2] : memref<8x32xf32, #tpu.memory_space<vmem>>, vector<8x32xf32>
    %c0_3 = arith.constant 0 : index
    %c0_4 = arith.constant 0 : index
    %3 = vector.load %arg3[%c0_3, %c0_4] : memref<32x64xbf16, #tpu.memory_space<vmem>>, vector<32x64xbf16>
    %cst = arith.constant dense<0.000000e+00> : vector<8x64xf32>
    %4 = tpu.matmul %1, %3, %cst {dimension_numbers = #tpu.dot_dimension_numbers<[1], [0], [0], [1], [0, 0, 1, 1], [], []>} : vector<8x32xbf16>, vector<32x64xbf16>, vector<8x64xf32> -> vector<8x64xf32>
    %5 = vector.extract_strided_slice %4 {offsets = [0, 0], sizes = [8, 32], strides = [1, 1]} : vector<8x64xf32> to vector<8x32xf32>
    %6 = vector.extract_strided_slice %2 {offsets = [0, 0], sizes = [1, 32], strides = [1, 1]} : vector<8x32xf32> to vector<1x32xf32>
    %7 = vector.broadcast %6 : vector<1x32xf32> to vector<8x32xf32>
    %8 = arith.addf %5, %7 : vector<8x32xf32>
    %c0_5 = arith.constant 0 : index
    %c0_6 = arith.constant 0 : index
    %9 = vector.load %arg2[%c0_5, %c0_6] : memref<8x8xbf16, #tpu.memory_space<vmem>>, vector<8x8xbf16>
    %10 = arith.truncf %8 : vector<8x32xf32> to vector<8x32xbf16>
    %cst_7 = arith.constant dense<0.000000e+00> : vector<8x32xf32>
    %11 = tpu.matmul %9, %10, %cst_7 {dimension_numbers = #tpu.dot_dimension_numbers<[1], [0], [0], [1], [0, 0, 1, 1], [], []>} : vector<8x8xbf16>, vector<8x32xbf16>, vector<8x32xf32> -> vector<8x32xf32>
    %12 = vector.extract_strided_slice %4 {offsets = [0, 32], sizes = [8, 32], strides = [1, 1]} : vector<8x64xf32> to vector<8x32xf32>
    %13 = arith.addf %12, %11 : vector<8x32xf32>
    %14 = vector.extract_strided_slice %2 {offsets = [1, 0], sizes = [1, 32], strides = [1, 1]} : vector<8x32xf32> to vector<1x32xf32>
    %15 = vector.broadcast %14 : vector<1x32xf32> to vector<8x32xf32>
    %16 = arith.addf %13, %15 : vector<8x32xf32>
    %cst_8 = arith.constant 5.000000e-01 : f32
    %17 = vector.broadcast %cst_8 : f32 to vector<8x32xf32>
    %18 = arith.mulf %17, %16 : vector<8x32xf32>
    %cst_9 = arith.constant 0.707106769 : f32
    %19 = vector.broadcast %cst_9 : f32 to vector<8x32xf32>
    %20 = arith.mulf %16, %19 : vector<8x32xf32>
    %21 = math.erf %20 : vector<8x32xf32>
    %cst_10 = arith.constant 1.000000e+00 : f32
    %22 = vector.broadcast %cst_10 : f32 to vector<8x32xf32>
    %23 = arith.addf %22, %21 : vector<8x32xf32>
    %24 = arith.mulf %18, %23 : vector<8x32xf32>
    %25 = arith.truncf %24 : vector<8x32xf32> to vector<8x32xbf16>
    %c0_11 = arith.constant 0 : index
    %c0_12 = arith.constant 0 : index
    %26 = vector.load %arg4[%c0_11, %c0_12] : memref<32x32xbf16, #tpu.memory_space<vmem>>, vector<32x32xbf16>
    %cst_13 = arith.constant dense<0.000000e+00> : vector<8x32xf32>
    %27 = tpu.matmul %25, %26, %cst_13 {dimension_numbers = #tpu.dot_dimension_numbers<[1], [0], [0], [1], [0, 0, 1, 1], [], []>} : vector<8x32xbf16>, vector<32x32xbf16>, vector<8x32xf32> -> vector<8x32xf32>
    %28 = vector.extract_strided_slice %2 {offsets = [2, 0], sizes = [1, 32], strides = [1, 1]} : vector<8x32xf32> to vector<1x32xf32>
    %29 = vector.broadcast %28 : vector<1x32xf32> to vector<8x32xf32>
    %30 = arith.addf %27, %29 : vector<8x32xf32>
    %c0_14 = arith.constant 0 : index
    %c0_15 = arith.constant 0 : index
    %31 = vector.load %arg1[%c0_14, %c0_15] : memref<8x32xf32, #tpu.memory_space<vmem>>, vector<8x32xf32>
    %32 = arith.addf %31, %30 : vector<8x32xf32>
    %c0_16 = arith.constant 0 : index
    %c0_17 = arith.constant 0 : index
    %33 = vector.load %arg6[%c0_16, %c0_17] : memref<8x32xf32, #tpu.memory_space<vmem>>, vector<8x32xf32>
    tpu.vector_store %arg6[%c0_16, %c0_17], %32 {strides = array<i32>} : memref<8x32xf32, #tpu.memory_space<vmem>>, vector<8x32xf32>,
    return
  }
  func.func @transform_0(%arg0: i32) -> (i32, i32) {
    %c0_i32 = arith.constant 0 : i32
    %c0_i32_0 = arith.constant 0 : i32
    return %arg0, %c0_i32 : i32, i32
  }
  func.func @transform_1(%arg0: i32) -> (i32, i32) {
    %c0_i32 = arith.constant 0 : i32
    %c0_i32_0 = arith.constant 0 : i32
    %c0_i32_1 = arith.constant 0 : i32
    return %c0_i32, %c0_i32_0 : i32, i32
  }
  func.func @transform_2(%arg0: i32) -> (i32, i32) {
    %c0_i32 = arith.constant 0 : i32
    %c0_i32_0 = arith.constant 0 : i32
    %c0_i32_1 = arith.constant 0 : i32
    return %c0_i32, %c0_i32_0 : i32, i32
  }
  func.func @transform_3(%arg0: i32) -> (i32, i32) {
    %c0_i32 = arith.constant 0 : i32
    %c0_i32_0 = arith.constant 0 : i32
    %c0_i32_1 = arith.constant 0 : i32
    return %c0_i32, %c0_i32_0 : i32, i32
  }
  func.func @transform_4(%arg0: i32) -> (i32, i32) {
    %c0_i32 = arith.constant 0 : i32
    %c0_i32_0 = arith.constant 0 : i32
    %c0_i32_1 = arith.constant 0 : i32
    return %c0_i32, %c0_i32_0 : i32, i32
  }
  func.func @transform_5(%arg0: i32) -> (i32, i32) {
    %c0_i32 = arith.constant 0 : i32
    %c0_i32_0 = arith.constant 0 : i32
    return %arg0, %c0_i32 : i32, i32
  }
}

</mosaic_0001>

<llo_original>
// kernel: tpu_custom_call.1
$region0: #{tpu_custom_call.1}
  #allocation0 [shape = 'u32[]', space=smem, size = 0x4, offset = 0x4, fixed_abs, tag = 'smem constant byte address 0x4 - core index']
  #allocation1 [shape = 'u32[72,128]{1,0:T(1,128)}', space=vmem, size = 0x9000, scoped, tag = 'internal scratch']
  %s0 = inlined_call_operand.hbm [shape: f32[16,32], index: 0, kind: input, shape index: {}]
  %s1 = inlined_call_operand.hbm [shape: bf16[8,8], index: 1, kind: input, shape index: {}]
  %s2 = inlined_call_operand.hbm [shape: bf16[32,64], index: 2, kind: input, shape index: {}]
  %s3 = inlined_call_operand.hbm [shape: bf16[32,32], index: 3, kind: input, shape index: {}]
  %s4 = inlined_call_operand.hbm [shape: f32[8,32], index: 4, kind: input, shape index: {}]
  %s5 = inlined_call_operand.hbm [shape: f32[16,32], index: 5, kind: output, shape index: {}]
  %s6 = sld [smem:[#allocation0]]
  $region73: #{tpu_custom_call.1} parent=0
    _
  %s8 = ssub.s32 1, %s6
  %s9 = scalar_select 0, %s8, %s6
  $region1: #{tpu_custom_call.1} parent=0
    #allocation2 [shape = 'u8[8192]{0}', space=vmem, size = 0x2000, scoped, tag = 'input window, operand 0']
    #allocation3 [shape = 's32[2]{0}', space=sflag, size = 0x8, scoped, tag = 'scoped memory for tpu_custom_call.1']
    #allocation4 [shape = 's32[2]{0}', space=sflag, size = 0x8, scoped, tag = 'scoped memory for tpu_custom_call.1']
    #allocation5 [shape = 'u8[2048]{0}', space=vmem, size = 0x800, scoped, tag = 'input window, operand 1, single buffered']
    #allocation6 [shape = 's32[1]{0}', space=sflag, size = 0x4, scoped, tag = 'scoped memory for tpu_custom_call.1']
    #allocation7 [shape = 'u8[8192]{0}', space=vmem, size = 0x2000, scoped, tag = 'input window, operand 2, single buffered']
    #allocation8 [shape = 'u8[8192]{0}', space=vmem, size = 0x2000, scoped, tag = 'input window, operand 3, single buffered']
    #allocation9 [shape = 's32[1]{0}', space=sflag, size = 0x4, scoped, tag = 'scoped memory for tpu_custom_call.1']
    #allocation10 [shape = 'u8[4096]{0}', space=vmem, size = 0x1000, scoped, tag = 'input window, operand 4, single buffered']
    #allocation11 [shape = 'u8[8192]{0}', space=vmem, size = 0x2000, scoped, tag = 'output window, operand 0']
    %10 = vsyncpa [#allocation3], 0
    %s11 = scalar_lea.sflag [#allocation3], 1
    %12 = vsyncpa %s11, 0
    %13 = vsyncpa [#allocation6], 0
    %14 = vsyncpa [#allocation9], 0
    %15 = vsyncpa [#allocation4], 0
    %s16 = scalar_lea.sflag [#allocation4], 1
    %17 = vsyncpa %s16, 0
    loop: start=0, step=1, limit=4
    $region2: #{tpu_custom_call.1} parent=1 // loop_pre_header
      _
    $region3: #{tpu_custom_call.1} parent=1 // loop_header
      %s19 = sphi 0, %s23
      %p20 = scmp.ge.s32.totalorder %s19, 4
      %s29 = sphi 0, %s31
      %s32 = sphi 0, %s29
      %s33 = sphi 0, %s32
      %s49 = sphi 0, %s33
      %s53 = sphi 0, %s53
      %s55 = sphi 0, %s53
      %s56 = sphi 0, %s55
      %s70 = sphi 0, %s56
      %s74 = sphi 0, %s74
      %s76 = sphi 0, %s74
      %s77 = sphi 0, %s76
      %s91 = sphi 0, %s77
      %s95 = sphi 0, %s95
      %s97 = sphi 0, %s95
      %s98 = sphi 0, %s97
      %s112 = sphi 0, %s98
      %s116 = sphi 0, %s116
      %s118 = sphi 0, %s116
      %s119 = sphi 0, %s118
      %s133 = sphi 0, %s119
      %s139 = sphi 0, %s141
      %s142 = sphi 0, %s139
      %s143 = sphi 0, %s142
      %s159 = sphi 0, %s143
    $region4: #{tpu_custom_call.1} parent=1 // loop_header_branch
      %22 = sbr.rel (%p20) target = $region8
    $region5: #{tpu_custom_call.1} parent=1 // loop_body
      %s24 = ssub.s32 %s19, 1
      %s25 = ssub.s32 %s19, 2
      %s26 = sadd.s32 %s19, 1
      %s27 = ssub.s32 %s19, %s26
      %p28 = scmp.eq.s32.totalorder %s27, 0
      %s30 = sadd.s32 %s29, 1
      %s31 = scalar_select %p28, %s29, %s30
      %p34 = pneg %p28
      %p35 = scmp.eq.s32.totalorder %s19, 1
      %p36 = por %p34, %p35
      %p37 = scmp.ne.s32.totalorder %s29, %s32
      %p38 = scmp.eq.s32.totalorder %s19, 0
      %p39 = por %p37, %p38
      %p40 = scmp.ne.s32.totalorder %s29, %s32
      %p41 = scmp.eq.s32.totalorder %s24, 1
      %p42 = por %p40, %p41
      %p43 = scmp.ne.s32.totalorder %s32, %s33
      %p44 = scmp.eq.s32.totalorder %s24, 0
      %p45 = por %p43, %p44
      %p46 = scmp.ne.s32.totalorder %s32, %s33
      %p47 = scmp.eq.s32.totalorder %s25, 1
      %p48 = por %p46, %p47
      %p50 = scmp.ne.s32.totalorder %s33, %s49
      %p51 = scmp.eq.s32.totalorder %s25, 0
      %p52 = por %p50, %p51
      %s54 = sadd.s32 %s53, 1
      %p57 = scmp.eq.s32.totalorder %s19, 1
      %p58 = scmp.ne.s32.totalorder %s53, %s55
      %p59 = scmp.eq.s32.totalorder %s19, 0
      %p60 = por %p58, %p59
      %p61 = scmp.ne.s32.totalorder %s53, %s55
      %p62 = scmp.eq.s32.totalorder %s24, 1
      %p63 = por %p61, %p62
      %p64 = scmp.ne.s32.totalorder %s55, %s56
      %p65 = scmp.eq.s32.totalorder %s24, 0
      %p66 = por %p64, %p65
      %p67 = scmp.ne.s32.totalorder %s55, %s56
      %p68 = scmp.eq.s32.totalorder %s25, 1
      %p69 = por %p67, %p68
      %p71 = scmp.ne.s32.totalorder %s56, %s70
      %p72 = scmp.eq.s32.totalorder %s25, 0
      %p73 = por %p71, %p72
      %s75 = sadd.s32 %s74, 1
      %p78 = scmp.eq.s32.totalorder %s19, 1
      %p79 = scmp.ne.s32.totalorder %s74, %s76
      %p80 = scmp.eq.s32.totalorder %s19, 0
      %p81 = por %p79, %p80
      %p82 = scmp.ne.s32.totalorder %s74, %s76
      %p83 = scmp.eq.s32.totalorder %s24, 1
      %p84 = por %p82, %p83
      %p85 = scmp.ne.s32.totalorder %s76, %s77
      %p86 = scmp.eq.s32.totalorder %s24, 0
      %p87 = por %p85, %p86
      %p88 = scmp.ne.s32.totalorder %s76, %s77
      %p89 = scmp.eq.s32.totalorder %s25, 1
      %p90 = por %p88, %p89
      %p92 = scmp.ne.s32.totalorder %s77, %s91
      %p93 = scmp.eq.s32.totalorder %s25, 0
      %p94 = por %p92, %p93
      %s96 = sadd.s32 %s95, 1
      %p99 = scmp.eq.s32.totalorder %s19, 1
      %p100 = scmp.ne.s32.totalorder %s95, %s97
      %p101 = scmp.eq.s32.totalorder %s19, 0
      %p102 = por %p100, %p101
      %p103 = scmp.ne.s32.totalorder %s95, %s97
      %p104 = scmp.eq.s32.totalorder %s24, 1
      %p105 = por %p103, %p104
      %p106 = scmp.ne.s32.totalorder %s97, %s98
      %p107 = scmp.eq.s32.totalorder %s24, 0
      %p108 = por %p106, %p107
      %p109 = scmp.ne.s32.totalorder %s97, %s98
      %p110 = scmp.eq.s32.totalorder %s25, 1
      %p111 = por %p109, %p110
      %p113 = scmp.ne.s32.totalorder %s98, %s112
      %p114 = scmp.eq.s32.totalorder %s25, 0
      %p115 = por %p113, %p114
      %s117 = sadd.s32 %s116, 1
      %p120 = scmp.eq.s32.totalorder %s19, 1
      %p121 = scmp.ne.s32.totalorder %s116, %s118
      %p122 = scmp.eq.s32.totalorder %s19, 0
      %p123 = por %p121, %p122
      %p124 = scmp.ne.s32.totalorder %s116, %s118
      %p125 = scmp.eq.s32.totalorder %s24, 1
      %p126 = por %p124, %p125
      %p127 = scmp.ne.s32.totalorder %s118, %s119
      %p128 = scmp.eq.s32.totalorder %s24, 0
      %p129 = por %p127, %p128
      %p130 = scmp.ne.s32.totalorder %s118, %s119
      %p131 = scmp.eq.s32.totalorder %s25, 1
      %p132 = por %p130, %p131
      %p134 = scmp.ne.s32.totalorder %s119, %s133
      %p135 = scmp.eq.s32.totalorder %s25, 0
      %p136 = por %p134, %p135
      %s137 = ssub.s32 %s19, %s26
      %p138 = scmp.eq.s32.totalorder %s137, 0
      %s140 = sadd.s32 %s139, 1
      %s141 = scalar_select %p138, %s139, %s140
      %p144 = pneg %p138
      %p145 = scmp.eq.s32.totalorder %s19, 1
      %p146 = por %p144, %p145
      %p147 = scmp.ne.s32.totalorder %s139, %s142
      %p148 = scmp.eq.s32.totalorder %s19, 0
      %p149 = por %p147, %p148
      %p150 = scmp.ne.s32.totalorder %s139, %s142
      %p151 = scmp.eq.s32.totalorder %s24, 1
      %p152 = por %p150, %p151
      %p153 = scmp.ne.s32.totalorder %s142, %s143
      %p154 = scmp.eq.s32.totalorder %s24, 0
      %p155 = por %p153, %p154
      %p156 = scmp.ne.s32.totalorder %s142, %s143
      %p157 = scmp.eq.s32.totalorder %s25, 1
      %p158 = por %p156, %p157
      %p160 = scmp.ne.s32.totalorder %s143, %s159
      %p161 = scmp.eq.s32.totalorder %s25, 0
      %p162 = por %p160, %p161
      %p163 = scmp.le.s32.totalorder 1, %s19
      %p164 = scmp.lt.s32.totalorder %s19, 3
      %p165 = pnand %p163, %p164
      %p166 = pneg %p165
      // Predicated region
      $region9: #{tpu_custom_call.1} parent=5 // pred_check
        _
      $region10: #{tpu_custom_call.1} parent=5 // pred_check_branch
        %168 = sbr.rel (%p165) target = $region12
      $region11: #{tpu_custom_call.1} parent=5 // pred_region
        %s169 = ssub.s32 %s19, 1
        // Predicated region
        $region13: #{tpu_custom_call.1} parent=11 // pred_check
          %p170 = pneg %p66
        $region14: #{tpu_custom_call.1} parent=11 // pred_check_branch
          %172 = sbr.rel (%p170) target = $region16
        $region15: #{tpu_custom_call.1} parent=11 // pred_region
          %174 = vsyncadd [#allocation6], 0
          %s176 = sshll.u32 %s1, 4
          %s177 = int_to_ptr.hbm [resolvable:$true] %s176
          %s178 = sshll.u32 [#allocation5], 4
          %s179 = int_to_ptr.vmem [resolvable:$true] %s178
          %181 = dma.hbm_to_vmem [thread:$0]  %s177, 64, %s179, [#allocation6]
        $region16: #{tpu_custom_call.1} parent=11 // pred_fallthru
          _
        // Predicated region
        $region17: #{tpu_custom_call.1} parent=11 // pred_check
          %p182 = pneg %p87
        $region18: #{tpu_custom_call.1} parent=11 // pred_check_branch
          %184 = sbr.rel (%p182) target = $region20
        $region19: #{tpu_custom_call.1} parent=11 // pred_region
          %186 = vsyncadd [#allocation6], 0
          %s187 = sshll.u32 %s2, 4
          %s188 = int_to_ptr.hbm [resolvable:$true] %s187
          %s189 = sshll.u32 [#allocation7], 4
          %s190 = int_to_ptr.vmem [resolvable:$true] %s189
          %195 = dma.hbm_to_vmem [thread:$0]  %s188, 256, %s190, [#allocation6], 64, 64, 4
        $region20: #{tpu_custom_call.1} parent=11 // pred_fallthru
          _
        // Predicated region
        $region21: #{tpu_custom_call.1} parent=11 // pred_check
          %p196 = pneg %p108
        $region22: #{tpu_custom_call.1} parent=11 // pred_check_branch
          %198 = sbr.rel (%p196) target = $region24
        $region23: #{tpu_custom_call.1} parent=11 // pred_region
          %200 = vsyncadd [#allocation9], 0
          %s201 = sshll.u32 %s3, 4
          %s202 = int_to_ptr.hbm [resolvable:$true] %s201
          %s203 = sshll.u32 [#allocation8], 4
          %s204 = int_to_ptr.vmem [resolvable:$true] %s203
          %209 = dma.hbm_to_vmem [thread:$0]  %s202, 256, %s204, [#allocation9], 64, 64, 4
        $region24: #{tpu_custom_call.1} parent=11 // pred_fallthru
          _
        // Predicated region
        $region25: #{tpu_custom_call.1} parent=11 // pred_check
          %p210 = pneg %p129
        $region26: #{tpu_custom_call.1} parent=11 // pred_check_branch
          %212 = sbr.rel (%p210) target = $region28
        $region27: #{tpu_custom_call.1} parent=11 // pred_region
          %214 = vsyncadd [#allocation9], 0
          %s216 = sshll.u32 %s4, 4
          %s217 = int_to_ptr.hbm [resolvable:$true] %s216
          %s218 = sshll.u32 [#allocation10], 4
          %s219 = int_to_ptr.vmem [resolvable:$true] %s218
          %221 = dma.hbm_to_vmem [thread:$0]  %s217, 128, %s219, [#allocation9]
        $region28: #{tpu_custom_call.1} parent=11 // pred_fallthru
          _
      $region12: #{tpu_custom_call.1} parent=5 // pred_fallthru
        _
      %p222 = scmp.lt.s32.totalorder %s19, 2
      // Predicated region
      $region29: #{tpu_custom_call.1} parent=5 // pred_check
        %p223 = pneg %p222
      $region30: #{tpu_custom_call.1} parent=5 // pred_check_branch
        %225 = sbr.rel (%p223) target = $region32
      $region31: #{tpu_custom_call.1} parent=5 // pred_region
        // Predicated region
        $region33: #{tpu_custom_call.1} parent=31 // pred_check
          %p226 = pneg %p39
        $region34: #{tpu_custom_call.1} parent=31 // pred_check_branch
          %228 = sbr.rel (%p226) target = $region36
        $region35: #{tpu_custom_call.1} parent=31 // pred_region
          %s229 = sand.u32 %s29, 1
          %s230 = scalar_lea.sflag [#allocation3], %s229
          %s231 = sand.u32 %s29, 1
          %s232 = smul.addr %s231, 8
          %s233 = scalar_lea.vmem [#allocation2], %s232
          %235 = vsyncadd %s230, 0
          %s236 = smul.addr %s19, 8
          %s237 = scalar_lea.hbm %s0, %s236
          %s239 = sshll.u32 %s237, 4
          %s240 = int_to_ptr.hbm [resolvable:$true] %s239
          %s241 = sshll.u32 %s233, 4
          %s242 = int_to_ptr.vmem [resolvable:$true] %s241
          %244 = dma.hbm_to_vmem [thread:$0]  %s240, 128, %s242, %s230
        $region36: #{tpu_custom_call.1} parent=31 // pred_fallthru
          _
      $region32: #{tpu_custom_call.1} parent=5 // pred_fallthru
        _
      %p245 = scmp.le.s32.totalorder 1, %s19
      %p246 = scmp.lt.s32.totalorder %s19, 3
      %p247 = pnand %p245, %p246
      %p248 = pneg %p247
      // Predicated region
      $region37: #{tpu_custom_call.1} parent=5 // pred_check
        _
      $region38: #{tpu_custom_call.1} parent=5 // pred_check_branch
        %250 = sbr.rel (%p247) target = $region40
      $region39: #{tpu_custom_call.1} parent=5 // pred_region
        %s251 = ssub.s32 %s19, 1
        %s252 = sand.u32 %s32, 1
        %s253 = scalar_lea.sflag [#allocation3], %s252
        %s254 = sand.u32 %s32, 1
        %s255 = smul.addr %s254, 8
        %s256 = scalar_lea.vmem [#allocation2], %s255
        // Predicated region
        $region41: #{tpu_custom_call.1} parent=39 // pred_check
          %p257 = pneg %p45
        $region42: #{tpu_custom_call.1} parent=39 // pred_check_branch
          %259 = sbr.rel (%p257) target = $region44
        $region43: #{tpu_custom_call.1} parent=39 // pred_region
          %261 = dma.done %s253, 128
        $region44: #{tpu_custom_call.1} parent=39 // pred_fallthru
          _
        // Predicated region
        $region45: #{tpu_custom_call.1} parent=39 // pred_check
          %p262 = pneg %p66
        $region46: #{tpu_custom_call.1} parent=39 // pred_check_branch
          %264 = sbr.rel (%p262) target = $region48
        $region47: #{tpu_custom_call.1} parent=39 // pred_region
          %266 = dma.done [#allocation6], 64
        $region48: #{tpu_custom_call.1} parent=39 // pred_fallthru
          _
        // Predicated region
        $region49: #{tpu_custom_call.1} parent=39 // pred_check
          %p267 = pneg %p87
        $region50: #{tpu_custom_call.1} parent=39 // pred_check_branch
          %269 = sbr.rel (%p267) target = $region52
        $region51: #{tpu_custom_call.1} parent=39 // pred_region
          %271 = dma.done [#allocation6], 256
        $region52: #{tpu_custom_call.1} parent=39 // pred_fallthru
          _
        // Predicated region
        $region53: #{tpu_custom_call.1} parent=39 // pred_check
          %p272 = pneg %p108
        $region54: #{tpu_custom_call.1} parent=39 // pred_check_branch
          %274 = sbr.rel (%p272) target = $region56
        $region55: #{tpu_custom_call.1} parent=39 // pred_region
          %276 = dma.done [#allocation9], 256
        $region56: #{tpu_custom_call.1} parent=39 // pred_fallthru
          _
        // Predicated region
        $region57: #{tpu_custom_call.1} parent=39 // pred_check
          %p277 = pneg %p129
        $region58: #{tpu_custom_call.1} parent=39 // pred_check_branch
          %279 = sbr.rel (%p277) target = $region60
        $region59: #{tpu_custom_call.1} parent=39 // pred_region
          %281 = dma.done [#allocation9], 128
        $region60: #{tpu_custom_call.1} parent=39 // pred_fallthru
          _
        %s282 = sand.u32 %s32, 1
        %s283 = scalar_lea.sflag [#allocation3], %s282
        %s284 = sand.u32 %s32, 1
        %s285 = smul.addr %s284, 8
        %s286 = scalar_lea.vmem [#allocation2], %s285
        %p287 = pneg %p45
        %p288 = pneg %p42
        %p289 = pneg %p66
        %p290 = pneg %p63
        %p291 = pneg %p87
        %p292 = pneg %p84
        %p293 = pneg %p108
        %p294 = pneg %p105
        %p295 = pneg %p129
        %p296 = pneg %p126
        %p297 = pneg %p155
        %p298 = pneg %p152
        %s299 = sand.u32 %s142, 1
        %s300 = scalar_lea.sflag [#allocation4], %s299
        %s301 = sand.u32 %s142, 1
        %s302 = smul.addr %s301, 8
        %s303 = scalar_lea.vmem [#allocation11], %s302
        %v305 = vld [vmem:[%s256] sm:$0xff]
        %v306 = vpack.c.bf16 %v305, %v305
        %v307 = vld [vmem:[#allocation10] sm:$0xff]
        %v308 = vld [vmem:[#allocation7] sm:$0xf]
        %v309 = vld [vmem:[#allocation7 + $0x4] sm:$0xf]
        %v310 = vld [vmem:[#allocation7 + $0x8] sm:$0xf]
        %v311 = vld [vmem:[#allocation7 + $0xc] sm:$0xf]
        %v316 = vunpack.c.l.b16 %v308
        %v317 = vunpack.c.l.b16 %v309
        %v318 = vunpack.c.l.b16 %v310
        %v319 = vunpack.c.l.b16 %v311
        %v320 = vpack.c.b16 %v317, %v316
        %v321 = vpack.c.b16 %v319, %v318
        %vm324 = vcmask 261120
        %v326 = vsel %vm324, %v306, 0
        %328 = vmatpush.bf16.msra.mxu0 0
        %329 = vmatpush.bf16.msra.mxu0 0
        %330 = vmatpush.bf16.msra.mxu0 0
        %331 = vmatpush.bf16.msra.mxu0 0
        %332 = vmatpush.bf16.msra.mxu0 0
        %333 = vmatpush.bf16.msra.mxu0 0
        %334 = vmatpush.bf16.msra.mxu0 %v321
        %335 = vmatpush.bf16.msra.mxu0 %v320
        %336 = vmatmul.bf16.gmra.mxu0 %v326
        %v337 = vpop.f32.mrf.mxu0
        %v338 = vadd.f32 0.0, %v337
        %v339 = vpop.f32.mrf.mxu0
        %340 = vdwg.mxu0
        %v341 = vperm.slane %v307, 0
        %v342 = vadd.f32 %v338, %v341
        %v343 = vld [vmem:[#allocation5] sm:$0xf]
        %v344 = vpack.c.bf16 %v342, %v342
        %vm345 = vcmask 64512
        %v347 = vsel %vm345, %v343, 0
        %vm349 = vcmask 1043456
        %v351 = vsel %vm349, %v344, 0
        %353 = vmatpush.bf16.msra.mxu0 0
        %354 = vmatpush.bf16.msra.mxu0 0
        %355 = vmatpush.bf16.msra.mxu0 0
        %356 = vmatpush.bf16.msra.mxu0 0
        %357 = vmatpush.bf16.msra.mxu0 0
        %358 = vmatpush.bf16.msra.mxu0 0
        %359 = vmatpush.bf16.msra.mxu0 0
        %360 = vmatpush.bf16.msra.mxu0 %v351
        %361 = vmatmul.bf16.gmra.mxu0 %v347
        %v362 = vpop.f32.mrf.mxu0
        %v363 = vadd.f32 0.0, %v362
        %v364 = vpop.f32.mrf.mxu0
        %365 = vdwg.mxu0
        %367 = vrot.lane.b32.xlu0 %v363, 32
        %v368 = vpop.permute.xlu0 %367
        %v370 = vadd.f32 %v338, %v368
        %v371 = vperm.slane %v307, 1
        %373 = vrot.lane.b32.xlu0 %v371, 32
        %v374 = vpop.permute.xlu0 %373
        %v376 = vadd.f32 %v370, %v374
        %v377 = vmul.f32 %v376, 0.5
        %v378 = vmul.f32 %v376, 0.70710677
        %v379 = vmul.f32 %v378, %v378
        %v380 = vmin.f32 16.0, %v379
        %v381 = vmul.f32 %v380, 2.1237322e-06
        %v382 = vadd.f32 %v381, 0.00028619796
        %v383 = vmul.f32 %v380, %v382
        %v384 = vadd.f32 %v383, 0.0036580483
        %v385 = vmul.f32 %v380, %v384
        %v386 = vadd.f32 %v385, 0.05243302
        %v387 = vmul.f32 %v380, %v386
        %v388 = vadd.f32 %v387, 0.18741608
        %v389 = vmul.f32 %v380, %v388
        %v390 = vadd.f32 %v389, 1.1283791
        %v391 = vmul.f32 %v378, %v390
        %v392 = vmul.f32 %v380, 3.8918573e-05
        %v393 = vadd.f32 %v392, 0.001143296
        %v394 = vmul.f32 %v380, %v393
        %v395 = vadd.f32 %v394, 0.014752088
        %v396 = vmul.f32 %v380, %v395
        %v397 = vadd.f32 %v396, 0.112945676
        %v398 = vmul.f32 %v380, %v397
        %v399 = vadd.f32 %v398, 0.4994258
        %v400 = vmul.f32 %v380, %v399
        %v401 = vadd.f32 %v400, 1.0
        %v402 = vrcp.pop %v401
        %v403 = vmul.f32 %v401, %v402
        %v404 = vsub.f32 1.0, %v403
        %v405 = vmul.f32 %v402, %v404
        %v406 = vadd.f32 %v402, %v405
        %vm407 = vweird.f32 %v401
        %vm408 = vweird.f32 %v402
        %vm409 = vmor %vm407, %vm408
        %v410 = vsel %vm409, %v402, %v406
        %v411 = vand.u32 2147483647, %v401
        %vm412 = vcmp.eq.f32.partialorder %v411, 8.507059e+37
        %v413 = vand.u32 %v401, 2147483648
        %v414 = vor.u32 1.1754944e-38, %v413
        %v415 = vsel %vm412, %v414, %v410
        %v416 = vmul.f32 %v391, %v415
        %v417 = vmin.f32 %v416, 1.0
        %v418 = vmax.f32 %v417, -1.0
        %v419 = vadd.f32 %v418, 1.0
        %v420 = vmul.f32 %v377, %v419
        %v421 = vpack.c.bf16 %v420, %v420
        %v422 = vld [vmem:[#allocation8] sm:$0xf]
        %v423 = vld [vmem:[#allocation8 + $0x4] sm:$0xf]
        %v424 = vld [vmem:[#allocation8 + $0x8] sm:$0xf]
        %v425 = vld [vmem:[#allocation8 + $0xc] sm:$0xf]
        %v426 = vperm.slane %v307, 2
        %428 = vrot.lane.b32.xlu0 %v421, 96
        %v429 = vpop.permute.xlu0 %428
        %v434 = vunpack.c.l.b16 %v422
        %v435 = vunpack.c.l.b16 %v423
        %v436 = vunpack.c.l.b16 %v424
        %v437 = vunpack.c.l.b16 %v425
        %v438 = vpack.c.b16 %v435, %v434
        %v439 = vpack.c.b16 %v437, %v436
        %v443 = vsel %vm324, %v429, 0
        %445 = vmatpush.bf16.msra.mxu0 0
        %446 = vmatpush.bf16.msra.mxu0 0
        %447 = vmatpush.bf16.msra.mxu0 0
        %448 = vmatpush.bf16.msra.mxu0 0
        %449 = vmatpush.bf16.msra.mxu0 0
        %450 = vmatpush.bf16.msra.mxu0 0
        %451 = vmatpush.bf16.msra.mxu0 %v439
        %452 = vmatpush.bf16.msra.mxu0 %v438
        %453 = vmatmul.bf16.gmra.mxu0 %v443
        %v454 = vpop.f32.mrf.mxu0
        %v455 = vadd.f32 %v426, %v454
        %v456 = vpop.f32.mrf.mxu0
        %457 = vdwg.mxu0
        %v458 = vadd.f32 %v305, %v455
        %459 = vst.msk [vmem:[%s303] sm:$0xff] %vm324, %v458
        %s460 = sand.u32 %s142, 1
        %s461 = scalar_lea.sflag [#allocation4], %s460
        %s462 = sand.u32 %s142, 1
        %s463 = smul.addr %s462, 8
        %s464 = scalar_lea.vmem [#allocation11], %s463
        // Predicated region
        $region61: #{tpu_custom_call.1} parent=39 // pred_check
          %p465 = pneg %p152
        $region62: #{tpu_custom_call.1} parent=39 // pred_check_branch
          %467 = sbr.rel (%p465) target = $region64
        $region63: #{tpu_custom_call.1} parent=39 // pred_region
          %469 = vsyncadd %s461, 0
          %s470 = smul.addr %s24, 8
          %s471 = scalar_lea.hbm %s5, %s470
          %s473 = sshll.u32 %s464, 4
          %s474 = int_to_ptr.vmem [resolvable:$true] %s473
          %s475 = sshll.u32 %s471, 4
          %s476 = int_to_ptr.hbm [resolvable:$true] %s475
          %478 = dma.vmem_to_hbm [thread:$0]  %s474, 128, %s476, %s461
        $region64: #{tpu_custom_call.1} parent=39 // pred_fallthru
          _
      $region40: #{tpu_custom_call.1} parent=5 // pred_fallthru
        _
      %p479 = scmp.le.s32.totalorder 2, %s19
      // Predicated region
      $region65: #{tpu_custom_call.1} parent=5 // pred_check
        %p480 = pneg %p479
      $region66: #{tpu_custom_call.1} parent=5 // pred_check_branch
        %482 = sbr.rel (%p480) target = $region68
      $region67: #{tpu_custom_call.1} parent=5 // pred_region
        %s483 = ssub.s32 %s19, 2
        // Predicated region
        $region69: #{tpu_custom_call.1} parent=67 // pred_check
          %p484 = pneg %p158
        $region70: #{tpu_custom_call.1} parent=67 // pred_check_branch
          %486 = sbr.rel (%p484) target = $region72
        $region71: #{tpu_custom_call.1} parent=67 // pred_region
          %s487 = sand.u32 %s143, 1
          %s488 = scalar_lea.sflag [#allocation4], %s487
          %s489 = sand.u32 %s143, 1
          %s490 = smul.addr %s489, 8
          %s491 = scalar_lea.vmem [#allocation11], %s490
          %493 = dma.done %s488, 128
        $region72: #{tpu_custom_call.1} parent=67 // pred_fallthru
          _
      $region68: #{tpu_custom_call.1} parent=5 // pred_fallthru
        _
    $region6: #{tpu_custom_call.1} parent=1 // loop_footer
      %s23 = sadd.s32 1, %s19
    $region7: #{tpu_custom_call.1} parent=1 // loop_footer_branch
      %18 = sbr.rel target = $region3
    $region8: #{tpu_custom_call.1} parent=1 // loop_exit
      _
    %494 = vsyncpa [#allocation3], 1
    %s495 = scalar_lea.sflag [#allocation3], 1
    %496 = vsyncpa %s495, 1
    %497 = vsyncpa [#allocation6], 1
    %498 = vsyncpa [#allocation9], 1
    %499 = vsyncpa [#allocation4], 1
    %s500 = scalar_lea.sflag [#allocation4], 1
    %501 = vsyncpa %s500, 1

</llo_original>
